<compile_context>
chip_gen: v6e
topology: v6e:2x2x1
jax: 0.10.0
libtpu: 0.0.40
codegen_flags: <defaults>
</compile_context>

<pallas_src>
import functools

import jax
import jax.numpy as jnp
from jax.experimental import pallas as pl
from jax.experimental.pallas import tpu as pltpu

LANES = 128      # fused hidden width, padded to one vreg lane tile
ACTOR_H = 32     # actor hidden width (fixed by the module definition)
BIAS_ROWS = 8    # sublane-aligned bias block (rows 0/1/2 = b1/b2/b3)


def _round_up(x, m):
    return ((x + m - 1) // m) * m


# -----------------------------------------------------------------------------
# Kernel
# -----------------------------------------------------------------------------
def actor_critic_kernel(x_ref, p_ref, out_ref, *, in_pad, n_actions):
    """Fused actor+critic forward for one batch tile.

    Parameter slab layout (all rows 128 lanes wide, zero padded):
      rows [0, in_pad)                : W1  (actor -> lanes [0,32), critic -> [32,32+fc1))
      rows [in_pad, in_pad+128)       : W2  block-diag(aw2, cw2)
      rows [in_pad+128, in_pad+256)   : W3  block-diag(aw3 -> lanes [0,A), cw3 -> lane A)
      rows [in_pad+256, in_pad+264)   : row0 = b1, row1 = b2, row2 = b3
    """
    x = x_ref[...]                                          # (TB, in_pad)
    w1 = p_ref[0:in_pad, :]                                 # (in_pad, 128)
    w2 = p_ref[in_pad:in_pad + LANES, :]                    # (128, 128)
    w3 = p_ref[in_pad + LANES:in_pad + 2 * LANES, :]        # (128, 128)
    bias = p_ref[in_pad + 2 * LANES:in_pad + 2 * LANES + BIAS_ROWS, :]
    b1 = bias[0:1, :]
    b2 = bias[1:2, :]
    b3 = bias[2:3, :]

    # Three full-width MXU dots (actor + critic fused via block-diag weights).
    h1 = jnp.tanh(jnp.dot(x, w1, preferred_element_type=jnp.float32) + b1)
    h2 = jnp.tanh(jnp.dot(h1, w2, preferred_element_type=jnp.float32) + b2)
    z = jnp.dot(h2, w3, preferred_element_type=jnp.float32) + b3   # (TB, 128)

    # Numerically stable softmax restricted to the first n_actions lanes.
    lane = jax.lax.broadcasted_iota(jnp.int32, z.shape, 1)
    act_mask = lane < n_actions
    m = jnp.max(jnp.where(act_mask, z, -jnp.inf), axis=-1, keepdims=True)
    e = jnp.where(act_mask, jnp.exp(z - m), 0.0)
    denom = jnp.sum(e, axis=-1, keepdims=True)
    inv = pl.reciprocal(denom, approx=True)      # EUP vrcp (otherwise-idle slot)
    inv = inv * (2.0 - denom * inv)              # one Newton step -> f32 accuracy
    pi = e * inv

    # Lane-dense combined output: pi in lanes [0, A), v in lane A, rest zero.
    v_lane = lane == n_actions
    out = jnp.where(act_mask, pi, jnp.where(v_lane, z, 0.0))
    out_ref[...] = out.astype(out_ref.dtype)


# -----------------------------------------------------------------------------
# Parameter packing (one lane-dense slab -> one DMA)
# -----------------------------------------------------------------------------
def pack_params(p, input_dim, n_actions, fc1_dims, fc2_dims):
    assert ACTOR_H + fc1_dims <= LANES, "critic fc1 too wide for fused layout"
    assert ACTOR_H + fc2_dims <= LANES, "critic fc2 too wide for fused layout"
    assert n_actions + 1 <= LANES, "too many actions for fused output"
    in_pad = _round_up(max(input_dim, 8), 8)

    w1 = jnp.zeros((in_pad, LANES), jnp.float32)
    w1 = w1.at[:input_dim, 0:ACTOR_H].set(p["aw1"])
    w1 = w1.at[:input_dim, ACTOR_H:ACTOR_H + fc1_dims].set(p["cw1"])

    w2 = jnp.zeros((LANES, LANES), jnp.float32)
    w2 = w2.at[0:ACTOR_H, 0:ACTOR_H].set(p["aw2"])
    w2 = w2.at[ACTOR_H:ACTOR_H + fc1_dims, ACTOR_H:ACTOR_H + fc2_dims].set(p["cw2"])

    w3 = jnp.zeros((LANES, LANES), jnp.float32)
    w3 = w3.at[0:ACTOR_H, 0:n_actions].set(p["aw3"])
    w3 = w3.at[ACTOR_H:ACTOR_H + fc2_dims, n_actions:n_actions + 1].set(p["cw3"])

    bias = jnp.zeros((BIAS_ROWS, LANES), jnp.float32)
    bias = bias.at[0, 0:ACTOR_H].set(p["ab1"][0])
    bias = bias.at[0, ACTOR_H:ACTOR_H + fc1_dims].set(p["cb1"][0])
    bias = bias.at[1, 0:ACTOR_H].set(p["ab2"][0])
    bias = bias.at[1, ACTOR_H:ACTOR_H + fc2_dims].set(p["cb2"][0])
    bias = bias.at[2, 0:n_actions].set(p["ab3"][0])
    bias = bias.at[2, n_actions:n_actions + 1].set(p["cb3"][0])

    slab = jnp.concatenate([w1, w2, w3, bias], axis=0)   # (in_pad + 264, 128)
    return slab, in_pad


# -----------------------------------------------------------------------------
# Wrapper
# -----------------------------------------------------------------------------
def actor_critic_forward(state, slab, n_actions, *, block_b=1024):
    """state: (B, input_dim) f32. slab: packed params. Returns (pi, v)."""
    B, input_dim = state.shape
    slab_rows = slab.shape[0]
    in_pad = slab_rows - (2 * LANES + BIAS_ROWS)

    # Batch tile: biggest 8-aligned tile <= block_b.  block_b=1024 keeps the
    # double-buffered tiles (~1.3 MiB total) far under scoped VMEM on v5e/v6e/v7x;
    # it can be raised on v6e's 128 MiB VMEM if desired.
    tb = min(block_b, _round_up(B, 8))
    b_pad = _round_up(B, tb)

    x = jnp.zeros((b_pad, in_pad), jnp.float32)
    x = x.at[:B, :input_dim].set(state.astype(jnp.float32))

    grid = (b_pad // tb,)

    cost = pl.CostEstimate(
        flops=int(2 * b_pad * (in_pad * LANES + 2 * LANES * LANES)),
        transcendentals=int(3 * b_pad * LANES),
        bytes_accessed=int(4 * (b_pad * in_pad + b_pad * LANES + slab.size)),
    )

    kernel = functools.partial(
        actor_critic_kernel, in_pad=in_pad, n_actions=n_actions
    )

    out = pl.pallas_call(
        kernel,
        out_shape=jax.ShapeDtypeStruct((b_pad, LANES), jnp.float32),
        grid=grid,
        in_specs=[
            pl.BlockSpec((tb, in_pad), lambda i: (i, 0)),         # batch-tiled x
            pl.BlockSpec((slab_rows, LANES), lambda i: (0, 0)),   # resident params
        ],
        out_specs=pl.BlockSpec((tb, LANES), lambda i: (i, 0)),    # lane-dense out
        compiler_params=pltpu.CompilerParams(
            dimension_semantics=("parallel",),
        ),
        cost_estimate=cost,
    )(x, slab)

    pi = out[:B, :n_actions]
    v = out[:B, n_actions:n_actions + 1]
    return pi, v


# -----------------------------------------------------------------------------
# Init + pure-JAX reference (mirrors the PyTorch module)
# -----------------------------------------------------------------------------
def init_params(key, input_dim, n_actions, fc1_dims, fc2_dims):
    def linear(k, fan_in, fan_out):
        kw, kb = jax.random.split(k)
        scale = 1.0 / jnp.sqrt(jnp.float32(fan_in))
        w = jax.random.normal(kw, (fan_in, fan_out), jnp.float32) * scale
        b = jax.random.normal(kb, (1, fan_out), jnp.float32) * 0.01
        return w, b

    keys = jax.random.split(key, 6)
    aw1, ab1 = linear(keys[0], input_dim, 32)
    aw2, ab2 = linear(keys[1], 32, 32)
    aw3, ab3 = linear(keys[2], 32, n_actions)
    cw1, cb1 = linear(keys[3], input_dim, fc1_dims)
    cw2, cb2 = linear(keys[4], fc1_dims, fc2_dims)
    cw3, cb3 = linear(keys[5], fc2_dims, 1)
    return dict(
        aw1=aw1, ab1=ab1, aw2=aw2, ab2=ab2, aw3=aw3, ab3=ab3,
        cw1=cw1, cb1=cb1, cw2=cw2, cb2=cb2, cw3=cw3, cb3=cb3,
    )


def reference_forward(state, p):
    h = jnp.tanh(state @ p["aw1"] + p["ab1"])
    h = jnp.tanh(h @ p["aw2"] + p["ab2"])
    logits = h @ p["aw3"] + p["ab3"]
    pi = jax.nn.softmax(logits, axis=-1)
    c = jnp.tanh(state @ p["cw1"] + p["cb1"])
    c = jnp.tanh(c @ p["cw2"] + p["cb2"])
    v = c @ p["cw3"] + p["cb3"]
    return pi, v


if __name__ == "__main__":
    # Small shapes consistent with the module: input_dims=(16,), fc1=fc2=32, 4 actions.
    B, INPUT_DIM, N_ACTIONS, FC1, FC2 = 8, 16, 4, 32, 32

    key = jax.random.PRNGKey(0)
    kx, kp = jax.random.split(key)
    state = jax.random.normal(kx, (B, INPUT_DIM), jnp.float32)
    params = init_params(kp, INPUT_DIM, N_ACTIONS, FC1, FC2)
    slab, _ = pack_params(params, INPUT_DIM, N_ACTIONS, FC1, FC2)

    pi, v = actor_critic_forward(state, slab, N_ACTIONS)
    pi = jax.block_until_ready(pi)
    v = jax.block_until_ready(v)

    pi_ref, v_ref = reference_forward(state, params)
    assert pi.shape == (B, N_ACTIONS) and v.shape == (B, 1)
    assert jnp.allclose(pi, pi_ref, atol=1e-5, rtol=1e-5)
    assert jnp.allclose(v, v_ref, atol=1e-5, rtol=1e-5)
    assert jnp.allclose(jnp.sum(pi, axis=-1), 1.0, atol=1e-5)

    print("KERNEL_OK")
</pallas_src>

<mosaic_0001>
module attributes {stable_mosaic.version = 11 : i64} {
  func.func @actor_critic_kernel(%arg0: i32, %arg1: memref<8x16xf32, #tpu.memory_space<vmem>>, %arg2: memref<280x128xf32, #tpu.memory_space<vmem>>, %arg3: memref<8x128xf32, #tpu.memory_space<vmem>>) attributes {dimension_semantics = [#tpu.dimension_semantics<parallel>], iteration_bounds = array<i64: 1>, scalar_prefetch = 0 : i64, scratch_operands = 0 : i64, tpu.core_type = #tpu.core_type<tc>, window_params = [{transform_indices = @transform_0, window_bounds = array<i64: 8, 16>}, {pipeline_mode = #tpu.pipeline_mode<synchronous>, transform_indices = @transform_1, window_bounds = array<i64: 280, 128>}, {transform_indices = @transform_2, window_bounds = array<i64: 8, 128>}]} {
    %c0 = arith.constant 0 : index
    %c0_0 = arith.constant 0 : index
    %0 = vector.load %arg1[%c0, %c0_0] : memref<8x16xf32, #tpu.memory_space<vmem>>, vector<8x16xf32>
    %c0_1 = arith.constant 0 : index
    %c0_2 = arith.constant 0 : index
    %1 = vector.load %arg2[%c0_1, %c0_2] : memref<280x128xf32, #tpu.memory_space<vmem>>, vector<16x128xf32>
    %c16 = arith.constant 16 : index
    %c0_3 = arith.constant 0 : index
    %2 = vector.load %arg2[%c16, %c0_3] : memref<280x128xf32, #tpu.memory_space<vmem>>, vector<128x128xf32>
    %c144 = arith.constant 144 : index
    %c0_4 = arith.constant 0 : index
    %3 = vector.load %arg2[%c144, %c0_4] : memref<280x128xf32, #tpu.memory_space<vmem>>, vector<128x128xf32>
    %c272 = arith.constant 272 : index
    %c0_5 = arith.constant 0 : index
    %4 = vector.load %arg2[%c272, %c0_5] : memref<280x128xf32, #tpu.memory_space<vmem>>, vector<8x128xf32>
    %5 = vector.extract_strided_slice %4 {offsets = [0, 0], sizes = [1, 128], strides = [1, 1]} : vector<8x128xf32> to vector<1x128xf32>
    %6 = vector.extract_strided_slice %4 {offsets = [1, 0], sizes = [1, 128], strides = [1, 1]} : vector<8x128xf32> to vector<1x128xf32>
    %7 = vector.extract_strided_slice %4 {offsets = [2, 0], sizes = [1, 128], strides = [1, 1]} : vector<8x128xf32> to vector<1x128xf32>
    %cst = arith.constant dense<0.000000e+00> : vector<8x128xf32>
    %8 = tpu.matmul %0, %1, %cst {dimension_numbers = #tpu.dot_dimension_numbers<[1], [0], [0], [1], [0, 0, 1, 1], [], []>} : vector<8x16xf32>, vector<16x128xf32>, vector<8x128xf32> -> vector<8x128xf32>
    %9 = vector.broadcast %5 : vector<1x128xf32> to vector<8x128xf32>
    %10 = arith.addf %8, %9 : vector<8x128xf32>
    %11 = math.tanh %10 : vector<8x128xf32>
    %cst_6 = arith.constant dense<0.000000e+00> : vector<8x128xf32>
    %12 = tpu.matmul %11, %2, %cst_6 {dimension_numbers = #tpu.dot_dimension_numbers<[1], [0], [0], [1], [0, 0, 1, 1], [], []>} : vector<8x128xf32>, vector<128x128xf32>, vector<8x128xf32> -> vector<8x128xf32>
    %13 = vector.broadcast %6 : vector<1x128xf32> to vector<8x128xf32>
    %14 = arith.addf %12, %13 : vector<8x128xf32>
    %15 = math.tanh %14 : vector<8x128xf32>
    %cst_7 = arith.constant dense<0.000000e+00> : vector<8x128xf32>
    %16 = tpu.matmul %15, %3, %cst_7 {dimension_numbers = #tpu.dot_dimension_numbers<[1], [0], [0], [1], [0, 0, 1, 1], [], []>} : vector<8x128xf32>, vector<128x128xf32>, vector<8x128xf32> -> vector<8x128xf32>
    %17 = vector.broadcast %7 : vector<1x128xf32> to vector<8x128xf32>
    %18 = arith.addf %16, %17 : vector<8x128xf32>
    %19 = tpu.iota {dimensions = array<i32: 1>} : vector<8x128xi32>
    %c4_i32 = arith.constant 4 : i32
    %20 = vector.broadcast %c4_i32 : i32 to vector<8x128xi32>
    %21 = arith.cmpi slt, %19, %20 : vector<8x128xi32>
    %cst_8 = arith.constant 0xFF800000 : f32
    %22 = vector.broadcast %cst_8 : f32 to vector<8x128xf32>
    %23 = arith.select %21, %18, %22 : vector<8x128xi1>, vector<8x128xf32>
    %cst_9 = arith.constant dense<0xFF800000> : vector<8xf32>
    %24 = vector.multi_reduction <maximumf>, %23, %cst_9 [1] : vector<8x128xf32> to vector<8xf32>
    %25 = vector.shape_cast %24 : vector<8xf32> to vector<8x1xf32>
    %26 = vector.broadcast %25 : vector<8x1xf32> to vector<8x128xf32>
    %27 = arith.subf %18, %26 : vector<8x128xf32>
    %28 = math.exp %27 : vector<8x128xf32>
    %cst_10 = arith.constant 0.000000e+00 : f32
    %29 = vector.broadcast %cst_10 : f32 to vector<8x128xf32>
    %30 = arith.select %21, %28, %29 : vector<8x128xi1>, vector<8x128xf32>
    %cst_11 = arith.constant dense<0.000000e+00> : vector<8xf32>
    %31 = vector.multi_reduction <add>, %30, %cst_11 [1] : vector<8x128xf32> to vector<8xf32>
    %32 = vector.shape_cast %31 : vector<8xf32> to vector<8x1xf32>
    %33 = tpu.reciprocal %32 {approx = true} : vector<8x1xf32> -> vector<8x1xf32>
    %34 = arith.mulf %32, %33 : vector<8x1xf32>
    %cst_12 = arith.constant 2.000000e+00 : f32
    %35 = vector.broadcast %cst_12 : f32 to vector<8x1xf32>
    %36 = arith.subf %35, %34 : vector<8x1xf32>
    %37 = arith.mulf %33, %36 : vector<8x1xf32>
    %38 = vector.broadcast %37 : vector<8x1xf32> to vector<8x128xf32>
    %39 = arith.mulf %30, %38 : vector<8x128xf32>
    %c4_i32_13 = arith.constant 4 : i32
    %40 = vector.broadcast %c4_i32_13 : i32 to vector<8x128xi32>
    %41 = arith.cmpi eq, %19, %40 : vector<8x128xi32>
    %cst_14 = arith.constant 0.000000e+00 : f32
    %42 = vector.broadcast %cst_14 : f32 to vector<8x128xf32>
    %43 = arith.select %41, %18, %42 : vector<8x128xi1>, vector<8x128xf32>
    %44 = arith.select %21, %39, %43 : vector<8x128xi1>, vector<8x128xf32>
    %c0_15 = arith.constant 0 : index
    %c0_16 = arith.constant 0 : index
    %45 = vector.load %arg3[%c0_15, %c0_16] : memref<8x128xf32, #tpu.memory_space<vmem>>, vector<8x128xf32>
    tpu.vector_store %arg3[%c0_15, %c0_16], %44 {strides = array<i32>} : memref<8x128xf32, #tpu.memory_space<vmem>>, vector<8x128xf32>,
    return
  }
  func.func @transform_0(%arg0: i32) -> (i32, i32) {
    %c0_i32 = arith.constant 0 : i32
    %c0_i32_0 = arith.constant 0 : i32
    return %arg0, %c0_i32 : i32, i32
  }
  func.func @transform_1(%arg0: i32) -> (i32, i32) {
    %c0_i32 = arith.constant 0 : i32
    %c0_i32_0 = arith.constant 0 : i32
    %c0_i32_1 = arith.constant 0 : i32
    return %c0_i32, %c0_i32_0 : i32, i32
  }
  func.func @transform_2(%arg0: i32) -> (i32, i32) {
    %c0_i32 = arith.constant 0 : i32
    %c0_i32_0 = arith.constant 0 : i32
    return %arg0, %c0_i32 : i32, i32
  }
}

</mosaic_0001>

<llo_original>
// kernel: tpu_custom_call.1
$region0: #{tpu_custom_call.1}
  #allocation0 [shape = 'u32[]', space=smem, size = 0x4, offset = 0x4, fixed_abs, tag = 'smem constant byte address 0x4 - core index']
  #allocation1 [shape = 'u32[144,128]{1,0:T(1,128)}', space=vmem, size = 0x12000, scoped, tag = 'internal scratch']
  %s0 = inlined_call_operand.hbm [shape: f32[8,16], index: 0, kind: input, shape index: {}]
  %s1 = inlined_call_operand.hbm [shape: f32[280,128], index: 1, kind: input, shape index: {}]
  %s2 = inlined_call_operand.hbm [shape: f32[8,128], index: 2, kind: output, shape index: {}]
  %s3 = sld [smem:[#allocation0]]
  $region26: #{tpu_custom_call.1} parent=0
    _
  %s5 = ssub.s32 1, %s3
  %s6 = scalar_select 0, %s5, %s3
  $region1: #{tpu_custom_call.1} parent=0
    #allocation2 [shape = 'u8[4096]{0}', space=vmem, size = 0x1000, scoped, tag = 'input window, operand 0, single buffered']
    #allocation3 [shape = 's32[1]{0}', space=sflag, size = 0x4, scoped, tag = 'scoped memory for tpu_custom_call.1']
    #allocation4 [shape = 's32[1]{0}', space=sflag, size = 0x4, scoped, tag = 'scoped memory for tpu_custom_call.1']
    #allocation5 [shape = 'u8[143360]{0}', space=vmem, size = 0x23000, scoped, tag = 'input window, operand 1, single buffered']
    #allocation6 [shape = 's32[1]{0}', space=sflag, size = 0x4, scoped, tag = 'scoped memory for tpu_custom_call.1']
    #allocation7 [shape = 'u8[4096]{0}', space=vmem, size = 0x1000, scoped, tag = 'output window, operand 0, single buffered']
    %7 = vsyncpa [#allocation3], 0
    %8 = vsyncpa [#allocation6], 0
    %9 = vsyncpa [#allocation4], 0
    // Predicated region
    $region2: #{tpu_custom_call.1} parent=1 // pred_check
      _
    $region3: #{tpu_custom_call.1} parent=1 // pred_check_branch
      %11 = sbr.rel (0) target = $region5
    $region4: #{tpu_custom_call.1} parent=1 // pred_region
      %s13 = ssub.s32 128, 128
      %14 = vsyncadd [#allocation3], %s13
      %s16 = sshll.u32 [#allocation2], 4
      %s17 = int_to_ptr.vmem [resolvable:$true] %s16
      %19 = dma.hbm_to_vmem [thread:$0]  %s0, 128, %s17, [#allocation3]
    $region5: #{tpu_custom_call.1} parent=1 // pred_fallthru
      _
    // Predicated region
    $region6: #{tpu_custom_call.1} parent=1 // pred_check
      _
    $region7: #{tpu_custom_call.1} parent=1 // pred_check_branch
      %21 = sbr.rel (0) target = $region9
    $region8: #{tpu_custom_call.1} parent=1 // pred_region
      %s23 = ssub.s32 4480, 4480
      %24 = vsyncadd [#allocation6], %s23
      %s25 = sshll.u32 [#allocation5], 4
      %s26 = int_to_ptr.vmem [resolvable:$true] %s25
      %31 = dma.hbm_to_vmem [thread:$0]  %s1, 4480, %s26, [#allocation6], 128, 128, 8
    $region9: #{tpu_custom_call.1} parent=1 // pred_fallthru
      _
    // Predicated region
    $region10: #{tpu_custom_call.1} parent=1 // pred_check
      _
    $region11: #{tpu_custom_call.1} parent=1 // pred_check_branch
      %33 = sbr.rel (0) target = $region13
    $region12: #{tpu_custom_call.1} parent=1 // pred_region
      %34 = dma.done [#allocation3], 128
    $region13: #{tpu_custom_call.1} parent=1 // pred_fallthru
      _
    // Predicated region
    $region14: #{tpu_custom_call.1} parent=1 // pred_check
      _
    $region15: #{tpu_custom_call.1} parent=1 // pred_check_branch
      %36 = sbr.rel (0) target = $region17
    $region16: #{tpu_custom_call.1} parent=1 // pred_region
      %37 = dma.done [#allocation6], 4480
    $region17: #{tpu_custom_call.1} parent=1 // pred_fallthru
      _
    %v38 = vld [vmem:[#allocation2] sm:$0xff]
    %v39 = vld [vmem:[#allocation5] sm:$0xff]
    %v40 = vld [vmem:[#allocation5 + $0x8] sm:$0xff]
    %v41 = vld [vmem:[#allocation5 + $0x10] sm:$0xff]
    %v42 = vld [vmem:[#allocation5 + $0x18] sm:$0xff]
    %v43 = vld [vmem:[#allocation5 + $0x20] sm:$0xff]
    %v44 = vld [vmem:[#allocation5 + $0x28] sm:$0xff]
    %v45 = vld [vmem:[#allocation5 + $0x30] sm:$0xff]
    %v46 = vld [vmem:[#allocation5 + $0x38] sm:$0xff]
    %v47 = vld [vmem:[#allocation5 + $0x40] sm:$0xff]
    %v48 = vld [vmem:[#allocation5 + $0x48] sm:$0xff]
    %v49 = vld [vmem:[#allocation5 + $0x50] sm:$0xff]
    %v50 = vld [vmem:[#allocation5 + $0x58] sm:$0xff]
    %v51 = vld [vmem:[#allocation5 + $0x60] sm:$0xff]
    %v52 = vld [vmem:[#allocation5 + $0x68] sm:$0xff]
    %v53 = vld [vmem:[#allocation5 + $0x70] sm:$0xff]
    %v54 = vld [vmem:[#allocation5 + $0x78] sm:$0xff]
    %v55 = vld [vmem:[#allocation5 + $0x80] sm:$0xff]
    %v56 = vld [vmem:[#allocation5 + $0x88] sm:$0xff]
    %v57 = vld [vmem:[#allocation5 + $0x90] sm:$0xff]
    %v58 = vld [vmem:[#allocation5 + $0x98] sm:$0xff]
    %v59 = vld [vmem:[#allocation5 + $0xa0] sm:$0xff]
    %v60 = vld [vmem:[#allocation5 + $0xa8] sm:$0xff]
    %v61 = vld [vmem:[#allocation5 + $0xb0] sm:$0xff]
    %v62 = vld [vmem:[#allocation5 + $0xb8] sm:$0xff]
    %v63 = vld [vmem:[#allocation5 + $0xc0] sm:$0xff]
    %v64 = vld [vmem:[#allocation5 + $0xc8] sm:$0xff]
    %v65 = vld [vmem:[#allocation5 + $0xd0] sm:$0xff]
    %v66 = vld [vmem:[#allocation5 + $0xd8] sm:$0xff]
    %v67 = vld [vmem:[#allocation5 + $0xe0] sm:$0xff]
    %v68 = vld [vmem:[#allocation5 + $0xe8] sm:$0xff]
    %v69 = vld [vmem:[#allocation5 + $0xf0] sm:$0xff]
    %v70 = vld [vmem:[#allocation5 + $0xf8] sm:$0xff]
    %v71 = vld [vmem:[#allocation5 + $0x100] sm:$0xff]
    %v72 = vld [vmem:[#allocation5 + $0x108] sm:$0xff]
    %v73 = vld [vmem:[#allocation5 + $0x110] sm:$0xff]
    %v74 = vlaneseq
    %v75 = vshrl.u32 %v74, 7
    %v76 = vsub.s32 0, %v75
    %v77 = vrot.slane %v73, %v76
    %vm78 = vcmask 130048
    %v80 = vsel %vm78, %v38, 0
    %82 = vmatprep.subr.mxu0 0.0
    %83 = vmatpush1.msra.mxu0 0.0
    %84 = vmatprep.subr.mxu0 0.0
    %85 = vmatpush1.msra.mxu0 0.0
    %86 = vmatprep.subr.mxu0 0.0
    %87 = vmatpush1.msra.mxu0 0.0
    %88 = vmatprep.subr.mxu0 0.0
    %89 = vmatpush1.msra.mxu0 0.0
    %90 = vmatprep.subr.mxu0 0.0
    %91 = vmatpush1.msra.mxu0 0.0
    %92 = vmatprep.subr.mxu0 0.0
    %93 = vmatpush1.msra.mxu0 0.0
    %94 = vmatprep.subr.mxu0 0.0
    %95 = vmatpush1.msra.mxu0 0.0
    %96 = vmatprep.subr.mxu0 0.0
    %97 = vmatpush1.msra.mxu0 0.0
    %98 = vmatprep.subr.mxu0 0.0
    %99 = vmatpush1.msra.mxu0 0.0
    %100 = vmatprep.subr.mxu0 0.0
    %101 = vmatpush1.msra.mxu0 0.0
    %102 = vmatprep.subr.mxu0 0.0
    %103 = vmatpush1.msra.mxu0 0.0
    %104 = vmatprep.subr.mxu0 0.0
    %105 = vmatpush1.msra.mxu0 0.0
    %106 = vmatprep.subr.mxu0 0.0
    %107 = vmatpush1.msra.mxu0 0.0
    %108 = vmatprep.subr.mxu0 0.0
    %109 = vmatpush1.msra.mxu0 0.0
    %110 = vmatprep.subr.mxu0 0.0
    %111 = vmatpush1.msra.mxu0 %v40
    %112 = vmatprep.subr.mxu0 0.0
    %113 = vmatpush1.msra.mxu0 %v39
    %114 = vmatprep.subr.mxu0 0.0
    %115 = vmatpush2.msra.mxu0 0.0
    %116 = vmatprep.subr.mxu0 0.0
    %117 = vmatpush2.msra.mxu0 0.0
    %118 = vmatprep.subr.mxu0 0.0
    %119 = vmatpush2.msra.mxu0 0.0
    %120 = vmatprep.subr.mxu0 0.0
    %121 = vmatpush2.msra.mxu0 0.0
    %122 = vmatprep.subr.mxu0 0.0
    %123 = vmatpush2.msra.mxu0 0.0
    %124 = vmatprep.subr.mxu0 0.0
    %125 = vmatpush2.msra.mxu0 0.0
    %126 = vmatprep.subr.mxu0 0.0
    %127 = vmatpush2.msra.mxu0 0.0
    %128 = vmatprep.subr.mxu0 0.0
    %129 = vmatpush2.msra.mxu0 0.0
    %130 = vmatprep.subr.mxu0 0.0
    %131 = vmatpush2.msra.mxu0 0.0
    %132 = vmatprep.subr.mxu0 0.0
    %133 = vmatpush2.msra.mxu0 0.0
    %134 = vmatprep.subr.mxu0 0.0
    %135 = vmatpush2.msra.mxu0 0.0
    %136 = vmatprep.subr.mxu0 0.0
    %137 = vmatpush2.msra.mxu0 0.0
    %138 = vmatprep.subr.mxu0 0.0
    %139 = vmatpush2.msra.mxu0 0.0
    %140 = vmatprep.subr.mxu0 0.0
    %141 = vmatpush2.msra.mxu0 0.0
    %142 = vmatprep.subr.mxu0 0.0
    %143 = vmatpush2.msra.mxu0 0.0
    %144 = vmatprep.subr.mxu0 0.0
    %145 = vmatpush2.msra.mxu0 0.0
    %146 = vmatprep.mubr.f32.mxu0 0.0
    %147 = vmatmul.mubr.f32.gmra.mxu0 %v80
    %v148 = vpop.f32.mrf.mxu0
    %v149 = vadd.f32 %v77, %v148
    %v150 = vpop.f32.mrf.mxu0
    %151 = vdwg.mxu0
    %v152 = vtanh.pop %v149
    %v153 = vlaneseq
    %v154 = vshrl.u32 %v153, 7
    %v155 = vsub.s32 1, %v154
    %v156 = vrot.slane %v73, %v155
    %157 = vmatprep.subr.mxu0 0.0
    %158 = vmatpush1.msra.mxu0 %v56
    %159 = vmatprep.subr.mxu0 0.0
    %160 = vmatpush1.msra.mxu0 %v55
    %161 = vmatprep.subr.mxu0 0.0
    %162 = vmatpush1.msra.mxu0 %v54
    %163 = vmatprep.subr.mxu0 0.0
    %164 = vmatpush1.msra.mxu0 %v53
    %165 = vmatprep.subr.mxu0 0.0
    %166 = vmatpush1.msra.mxu0 %v52
    %167 = vmatprep.subr.mxu0 0.0
    %168 = vmatpush1.msra.mxu0 %v51
    %169 = vmatprep.subr.mxu0 0.0
    %170 = vmatpush1.msra.mxu0 %v50
    %171 = vmatprep.subr.mxu0 0.0
    %172 = vmatpush1.msra.mxu0 %v49
    %173 = vmatprep.subr.mxu0 0.0
    %174 = vmatpush1.msra.mxu0 %v48
    %175 = vmatprep.subr.mxu0 0.0
    %176 = vmatpush1.msra.mxu0 %v47
    %177 = vmatprep.subr.mxu0 0.0
    %178 = vmatpush1.msra.mxu0 %v46
    %179 = vmatprep.subr.mxu0 0.0
    %180 = vmatpush1.msra.mxu0 %v45
    %181 = vmatprep.subr.mxu0 0.0
    %182 = vmatpush1.msra.mxu0 %v44
    %183 = vmatprep.subr.mxu0 0.0
    %184 = vmatpush1.msra.mxu0 %v43
    %185 = vmatprep.subr.mxu0 0.0
    %186 = vmatpush1.msra.mxu0 %v42
    %187 = vmatprep.subr.mxu0 0.0
    %188 = vmatpush1.msra.mxu0 %v41
    %189 = vmatprep.subr.mxu0 0.0
    %190 = vmatpush2.msra.mxu0 0.0
    %191 = vmatprep.subr.mxu0 0.0
    %192 = vmatpush2.msra.mxu0 0.0
    %193 = vmatprep.subr.mxu0 0.0
    %194 = vmatpush2.msra.mxu0 0.0
    %195 = vmatprep.subr.mxu0 0.0
    %196 = vmatpush2.msra.mxu0 0.0
    %197 = vmatprep.subr.mxu0 0.0
    %198 = vmatpush2.msra.mxu0 0.0
    %199 = vmatprep.subr.mxu0 0.0
    %200 = vmatpush2.msra.mxu0 0.0
    %201 = vmatprep.subr.mxu0 0.0
    %202 = vmatpush2.msra.mxu0 0.0
    %203 = vmatprep.subr.mxu0 0.0
    %204 = vmatpush2.msra.mxu0 0.0
    %205 = vmatprep.subr.mxu0 0.0
    %206 = vmatpush2.msra.mxu0 0.0
    %207 = vmatprep.subr.mxu0 0.0
    %208 = vmatpush2.msra.mxu0 0.0
    %209 = vmatprep.subr.mxu0 0.0
    %210 = vmatpush2.msra.mxu0 0.0
    %211 = vmatprep.subr.mxu0 0.0
    %212 = vmatpush2.msra.mxu0 0.0
    %213 = vmatprep.subr.mxu0 0.0
    %214 = vmatpush2.msra.mxu0 0.0
    %215 = vmatprep.subr.mxu0 0.0
    %216 = vmatpush2.msra.mxu0 0.0
    %217 = vmatprep.subr.mxu0 0.0
    %218 = vmatpush2.msra.mxu0 0.0
    %219 = vmatprep.subr.mxu0 0.0
    %220 = vmatpush2.msra.mxu0 0.0
    %221 = vmatprep.mubr.f32.mxu0 0.0
    %222 = vmatmul.mubr.f32.gmra.mxu0 %v152
    %v223 = vpop.f32.mrf.mxu0
    %v224 = vadd.f32 %v156, %v223
    %v225 = vpop.f32.mrf.mxu0
    %226 = vdwg.mxu0
    %v227 = vtanh.pop %v224
    %v228 = vlaneseq
    %v229 = vshrl.u32 %v228, 7
    %v230 = vsub.s32 2, %v229
    %v231 = vrot.slane %v73, %v230
    %232 = vmatprep.subr.mxu0 0.0
    %233 = vmatpush1.msra.mxu0 %v72
    %234 = vmatprep.subr.mxu0 0.0
    %235 = vmatpush1.msra.mxu0 %v71
    %236 = vmatprep.subr.mxu0 0.0
    %237 = vmatpush1.msra.mxu0 %v70
    %238 = vmatprep.subr.mxu0 0.0
    %239 = vmatpush1.msra.mxu0 %v69
    %240 = vmatprep.subr.mxu0 0.0
    %241 = vmatpush1.msra.mxu0 %v68
    %242 = vmatprep.subr.mxu0 0.0
    %243 = vmatpush1.msra.mxu0 %v67
    %244 = vmatprep.subr.mxu0 0.0
    %245 = vmatpush1.msra.mxu0 %v66
    %246 = vmatprep.subr.mxu0 0.0
    %247 = vmatpush1.msra.mxu0 %v65
    %248 = vmatprep.subr.mxu0 0.0
    %249 = vmatpush1.msra.mxu0 %v64
    %250 = vmatprep.subr.mxu0 0.0
    %251 = vmatpush1.msra.mxu0 %v63
    %252 = vmatprep.subr.mxu0 0.0
    %253 = vmatpush1.msra.mxu0 %v62
    %254 = vmatprep.subr.mxu0 0.0
    %255 = vmatpush1.msra.mxu0 %v61
    %256 = vmatprep.subr.mxu0 0.0
    %257 = vmatpush1.msra.mxu0 %v60
    %258 = vmatprep.subr.mxu0 0.0
    %259 = vmatpush1.msra.mxu0 %v59
    %260 = vmatprep.subr.mxu0 0.0
    %261 = vmatpush1.msra.mxu0 %v58
    %262 = vmatprep.subr.mxu0 0.0
    %263 = vmatpush1.msra.mxu0 %v57
    %264 = vmatprep.subr.mxu0 0.0
    %265 = vmatpush2.msra.mxu0 0.0
    %266 = vmatprep.subr.mxu0 0.0
    %267 = vmatpush2.msra.mxu0 0.0
    %268 = vmatprep.subr.mxu0 0.0
    %269 = vmatpush2.msra.mxu0 0.0
    %270 = vmatprep.subr.mxu0 0.0
    %271 = vmatpush2.msra.mxu0 0.0
    %272 = vmatprep.subr.mxu0 0.0
    %273 = vmatpush2.msra.mxu0 0.0
    %274 = vmatprep.subr.mxu0 0.0
    %275 = vmatpush2.msra.mxu0 0.0
    %276 = vmatprep.subr.mxu0 0.0
    %277 = vmatpush2.msra.mxu0 0.0
    %278 = vmatprep.subr.mxu0 0.0
    %279 = vmatpush2.msra.mxu0 0.0
    %280 = vmatprep.subr.mxu0 0.0
    %281 = vmatpush2.msra.mxu0 0.0
    %282 = vmatprep.subr.mxu0 0.0
    %283 = vmatpush2.msra.mxu0 0.0
    %284 = vmatprep.subr.mxu0 0.0
    %285 = vmatpush2.msra.mxu0 0.0
    %286 = vmatprep.subr.mxu0 0.0
    %287 = vmatpush2.msra.mxu0 0.0
    %288 = vmatprep.subr.mxu0 0.0
    %289 = vmatpush2.msra.mxu0 0.0
    %290 = vmatprep.subr.mxu0 0.0
    %291 = vmatpush2.msra.mxu0 0.0
    %292 = vmatprep.subr.mxu0 0.0
    %293 = vmatpush2.msra.mxu0 0.0
    %294 = vmatprep.subr.mxu0 0.0
    %295 = vmatpush2.msra.mxu0 0.0
    %296 = vmatprep.mubr.f32.mxu0 0.0
    %297 = vmatmul.mubr.f32.gmra.mxu0 %v227
    %v298 = vpop.f32.mrf.mxu0
    %v299 = vadd.f32 %v231, %v298
    %v300 = vpop.f32.mrf.mxu0
    %301 = vdwg.mxu0
    %v302 = vlaneseq
    %v303 = vand.u32 %v302, 127
    %vm304 = vcmp.lt.s32.totalorder %v303, 4
    %v305 = vsel %vm304, %v299, -inf
    %306 = vmax.xlane.f32.xlu0 %v305
    %v307 = vpop.xlane.xlu0 %306
    %v308 = vsub.f32 %v299, %v307
    %v309 = vmul.f32 %v308, 1.442695
    %v310 = vpow.pop %v309
    %v311 = vsel %vm304, %v310, 0.0
    %312 = vadd.xlane.f32.xlu0 %v311
    %v313 = vpop.xlane.xlu0 %312
    %v314 = vrcp.pop %v313
    %v315 = vmul.f32 %v313, %v314
    %v316 = vsub.f32 2.0, %v315
    %v317 = vmul.f32 %v314, %v316
    %v318 = vmul.f32 %v311, %v317
    %vm319 = vcmp.eq.s32.totalorder %v303, 4
    %v320 = vsel %vm319, %v299, 0.0
    %v321 = vsel %vm304, %v318, %v320
    %322 = vst [vmem:[#allocation7] sm:$0xff] %v321
    // Predicated region
    $region18: #{tpu_custom_call.1} parent=1 // pred_check
      _
    $region19: #{tpu_custom_call.1} parent=1 // pred_check_branch
      %324 = sbr.rel (0) target = $region21
    $region20: #{tpu_custom_call.1} parent=1 // pred_region
      %s326 = ssub.s32 128, 128
      %327 = vsyncadd [#allocation4], %s326
      %s329 = sshll.u32 [#allocation7], 4
      %s330 = int_to_ptr.vmem [resolvable:$true] %s329
      %332 = dma.vmem_to_hbm [thread:$0]  %s330, 128, %s2, [#allocation4]
    $region21: #{tpu_custom_call.1} parent=1 // pred_fallthru
      _
    // Predicated region
    $region22: #{tpu_custom_call.1} parent=1 // pred_check
      _
    $region23: #{tpu_custom_call.1} parent=1 // pred_check_branch
      %334 = sbr.rel (0) target = $region25
    $region24: #{tpu_custom_call.1} parent=1 // pred_region
      %335 = dma.done [#allocation4], 128
    $region25: #{tpu_custom_call.1} parent=1 // pred_fallthru
      _
    %336 = vsyncpa [#allocation3], 1
    %337 = vsyncpa [#allocation6], 1
    %338 = vsyncpa [#allocation4], 1

</llo_original>
